<compile_context>
chip_gen: v7x
topology: tpu7x:2x2x1
jax: 0.10.0
libtpu: 0.0.40
codegen_flags: <defaults>
</compile_context>

<pallas_src>
import functools

import jax
import jax.numpy as jnp
from jax import lax
from jax.experimental import pallas as pl
from jax.experimental.pallas import tpu as pltpu

_MIB = 1024 * 1024


def _round_up(x, m):
    return ((x + m - 1) // m) * m


def _vmem_cap_bytes():
    """Per-generation scoped-VMEM cap (bytes), with headroom for the compiler."""
    try:
        phys = int(pltpu.get_tpu_info().vmem_capacity_bytes)
    except Exception:
        phys = 64 * _MIB  # unknown chip: assume the smallest pool (v7x)
    if phys <= 64 * _MIB:
        # v7x: 64 MiB physical per TC -> leave scratch / spill headroom.
        return max(32 * _MIB, phys - 12 * _MIB)
    # v5e / v6e: 128 MiB physical -> allow well above the 16/32 MiB scoped default.
    return min(phys - 28 * _MIB, 100 * _MIB)


# ---------------------------------------------------------------------------
# Kernels
# ---------------------------------------------------------------------------

def _layer_norm(x, gamma, beta):
    mean = jnp.mean(x, axis=-1, keepdims=True)
    centered = x - mean
    var = jnp.mean(centered * centered, axis=-1, keepdims=True)
    return centered * lax.rsqrt(var + 1e-6) * gamma + beta


def _ffn_kernel(x_ref, w1_ref, b1_ref, w2_ref, b2_ref, gamma_ref, beta_ref,
                o_ref, *, n_sub):
    """Single-pass path: both bf16 weight matrices resident in VMEM."""
    sub = x_ref.shape[0] // n_sub
    gamma = gamma_ref[...]
    beta = beta_ref[...]
    b1 = b1_ref[...]
    b2 = b2_ref[...]
    # Process the row tile in n_sub statically-unrolled sub-tiles so that the
    # VPU work (LayerNorm / bias / ReLU / residual / bf16 casts) of sub-tile
    # j+1 can overlap the MXU matmuls of sub-tile j in the VLIW schedule.
    for j in range(n_sub):
        rows = pl.ds(j * sub, sub)
        x = x_ref[rows, :].astype(jnp.float32)
        xn = _layer_norm(x, gamma, beta)
        h = jnp.dot(xn.astype(jnp.bfloat16), w1_ref[...],
                    preferred_element_type=jnp.float32) + b1
        h = jnp.maximum(h, 0.0)
        out = jnp.dot(h.astype(jnp.bfloat16), w2_ref[...],
                      preferred_element_type=jnp.float32) + b2
        # TODO(synk): dropout is an identity at inference; a training-mode
        # kernel would draw a mask via pltpu.prng_seed / pltpu.prng_random_bits.
        o_ref[rows, :] = (out + x).astype(o_ref.dtype)


def _ffn_stream_kernel(x_ref, w1_ref, b1_ref, w2_ref, b2_ref, gamma_ref, beta_ref,
                       o_ref, acc_ref, xn_ref):
    """Weight-streaming path: grid axis 1 walks d_hid tiles (weights too big)."""
    h_idx = pl.program_id(1)

    @pl.when(h_idx == 0)
    def _():
        x = x_ref[...].astype(jnp.float32)
        xn_ref[...] = _layer_norm(x, gamma_ref[...], beta_ref[...]).astype(jnp.bfloat16)
        acc_ref[...] = jnp.zeros_like(acc_ref)

    h = jnp.dot(xn_ref[...], w1_ref[...],
                preferred_element_type=jnp.float32) + b1_ref[...]
    h = jnp.maximum(h, 0.0)
    acc_ref[...] += jnp.dot(h.astype(jnp.bfloat16), w2_ref[...],
                            preferred_element_type=jnp.float32)

    @pl.when(h_idx == pl.num_programs(1) - 1)
    def _():
        o_ref[...] = (acc_ref[...] + b2_ref[...]
                      + x_ref[...].astype(jnp.float32)).astype(o_ref.dtype)


# ---------------------------------------------------------------------------
# Wrapper
# ---------------------------------------------------------------------------

def positionwise_feed_forward(x, w1, b1, w2, b2, gamma, beta, *,
                              tm=512, force_hid_tile=None):
    """PositionwiseFeedForward forward pass (inference; dropout = identity).

    x:          (B, S, d_in) float32
    w1:         (d_in, d_hid)  nn.Linear weight, pre-transposed (bf16 preferred)
    b1:         (d_hid,)
    w2:         (d_hid, d_in)  pre-transposed (bf16 preferred)
    b2, gamma, beta: (d_in,)   LayerNorm eps = 1e-6

    Pre-cast w1/w2 to bf16 once at parameter-init time so the f32->bf16 copy
    is not on the per-call hot path (the wrapper only casts if needed).
    """
    B, S, d_in = x.shape
    d_hid = w1.shape[1]
    M = B * S
    x2 = x.reshape(M, d_in)

    # bf16 weights (no-op when pre-cast by the caller).
    w1_bf = w1 if w1.dtype == jnp.bfloat16 else w1.astype(jnp.bfloat16)
    w2_bf = w2 if w2.dtype == jnp.bfloat16 else w2.astype(jnp.bfloat16)

    # 2D (1, d) views for biases / LN params so they map cleanly to VMEM tiles.
    b1_2 = b1.reshape(1, d_hid).astype(jnp.float32)
    b2_2 = b2.reshape(1, d_in).astype(jnp.float32)
    g_2 = gamma.reshape(1, d_in).astype(jnp.float32)
    be_2 = beta.reshape(1, d_in).astype(jnp.float32)

    cap = _vmem_cap_bytes()

    def single_pass_bytes(tm_b):
        return (2 * 2 * tm_b * d_in * 4          # x + out tiles, double-buffered
                + 4 * d_in * d_hid               # w1 + w2 (bf16), single-buffered
                + 8 * (d_hid + 3 * d_in) * 4     # biases / LN params (padded rows)
                + tm_b * d_hid * 4               # h intermediate
                + 3 * tm_b * d_in * 4)           # xn / out / residual working set

    def stream_bytes(tm_b, th):
        return (2 * 2 * tm_b * d_in * 4          # x + out tiles, double-buffered
                + 2 * 2 * d_in * th * 2          # w1 col-tile + w2 row-tile (bf16, dbl-buf)
                + 2 * 8 * th * 4                 # b1 tile, double-buffered
                + 8 * 3 * d_in * 4               # b2 / gamma / beta, single-buffered
                + tm_b * d_in * 4                # f32 accumulator scratch
                + tm_b * d_in * 2                # bf16 LayerNorm scratch
                + tm_b * th * 4)                 # h intermediate

    # Row-tile size: multiple of 8 (ideally 16 so the kernel can sub-tile it),
    # no larger than the (rounded-up) number of rows.
    tm_eff = min(tm, _round_up(M, 8))
    tm_eff = max(8, (tm_eff // 8) * 8)

    use_stream = force_hid_tile is not None
    if not use_stream:
        # Shrink the row tile (never below 256) before giving up on keeping
        # both weight matrices resident.
        while tm_eff > 256 and single_pass_bytes(tm_eff) * 5 // 4 > cap:
            tm_eff = max(256, ((tm_eff // 2) // 8) * 8)
        use_stream = single_pass_bytes(tm_eff) * 5 // 4 > cap

    n_sub = 2 if (tm_eff % 16 == 0) else 1
    grid_m = pl.cdiv(M, tm_eff)   # partial last block is masked by Pallas

    cost = pl.CostEstimate(
        flops=4 * M * d_in * d_hid,                       # two matmuls
        transcendentals=M,                                # rsqrt per token row
        bytes_accessed=(2 * M * d_in * 4                  # x in + out
                        + 4 * d_in * d_hid                # bf16 weights
                        + (d_hid + 3 * d_in) * 4))        # biases / LN params

    if not use_stream:
        # ---------------- single-pass: weights resident in VMEM ----------------
        est = single_pass_bytes(tm_eff)
        vmem_limit = int(min(cap, max(32 * _MIB, est * 5 // 4)))
        kernel = functools.partial(_ffn_kernel, n_sub=n_sub)

        def call(weight_mode):
            def res(shape):
                kw = {} if weight_mode is None else dict(pipeline_mode=weight_mode)
                return pl.BlockSpec(shape, lambda i: (0, 0), **kw)
            return pl.pallas_call(
                kernel,
                out_shape=jax.ShapeDtypeStruct((M, d_in), x.dtype),
                grid_spec=pl.GridSpec(
                    grid=(grid_m,),
                    in_specs=[
                        pl.BlockSpec((tm_eff, d_in), lambda i: (i, 0)),   # x rows
                        res((d_in, d_hid)),                               # w1 (resident)
                        res((1, d_hid)),                                  # b1
                        res((d_hid, d_in)),                               # w2 (resident)
                        res((1, d_in)),                                   # b2
                        res((1, d_in)),                                   # gamma
                        res((1, d_in)),                                   # beta
                    ],
                    out_specs=pl.BlockSpec((tm_eff, d_in), lambda i: (i, 0)),
                ),
                compiler_params=pltpu.CompilerParams(
                    dimension_semantics=("parallel",),
                    vmem_limit_bytes=vmem_limit,
                ),
                cost_estimate=cost,
            )(x2, w1_bf, b1_2, w2_bf, b2_2, g_2, be_2)

        try:
            out = call(pl.Buffered(1))   # single-buffer the constant-index operands
        except Exception:
            out = call(None)             # fall back to default double-buffering

    else:
        # ------------- weight-streaming: tile d_hid, accumulate in VMEM ----------
        if force_hid_tile is not None:
            th = int(force_hid_tile)
        else:
            th = _round_up(d_hid, 128)
            while th > 128 and stream_bytes(tm_eff, th) * 5 // 4 > cap:
                th = _round_up(th // 2, 128)
        th = min(th, _round_up(d_hid, 128))
        if th != d_hid:
            th = max(128, (th // 128) * 128)   # lane-aligned hidden tile
        hp = _round_up(d_hid, th)
        if hp != d_hid:
            # Zero-pad the hidden dim: extra units have zero w1/b1/w2 rows and
            # therefore contribute exactly zero through relu + w2.
            w1_bf = jnp.pad(w1_bf, ((0, 0), (0, hp - d_hid)))
            w2_bf = jnp.pad(w2_bf, ((0, hp - d_hid), (0, 0)))
            b1_2 = jnp.pad(b1_2, ((0, 0), (0, hp - d_hid)))

        est = stream_bytes(tm_eff, th)
        vmem_limit = int(min(cap, max(32 * _MIB, est * 5 // 4)))

        def call(weight_mode):
            def res(shape):
                kw = {} if weight_mode is None else dict(pipeline_mode=weight_mode)
                return pl.BlockSpec(shape, lambda i, h: (0, 0), **kw)
            return pl.pallas_call(
                _ffn_stream_kernel,
                out_shape=jax.ShapeDtypeStruct((M, d_in), x.dtype),
                grid_spec=pltpu.PrefetchScalarGridSpec(
                    num_scalar_prefetch=0,
                    grid=(grid_m, hp // th),
                    in_specs=[
                        pl.BlockSpec((tm_eff, d_in), lambda i, h: (i, 0)),  # x rows
                        pl.BlockSpec((d_in, th), lambda i, h: (0, h)),      # w1 col tile
                        pl.BlockSpec((1, th), lambda i, h: (0, h)),         # b1 tile
                        pl.BlockSpec((th, d_in), lambda i, h: (h, 0)),      # w2 row tile
                        res((1, d_in)),                                     # b2
                        res((1, d_in)),                                     # gamma
                        res((1, d_in)),                                     # beta
                    ],
                    out_specs=pl.BlockSpec((tm_eff, d_in), lambda i, h: (i, 0)),
                    scratch_shapes=[
                        pltpu.VMEM((tm_eff, d_in), jnp.float32),    # f32 accumulator
                        pltpu.VMEM((tm_eff, d_in), jnp.bfloat16),   # LayerNorm(x)
                    ],
                ),
                compiler_params=pltpu.CompilerParams(
                    dimension_semantics=("parallel", "arbitrary"),
                    vmem_limit_bytes=vmem_limit,
                ),
                cost_estimate=cost,
            )(x2, w1_bf, b1_2, w2_bf, b2_2, g_2, be_2)

        try:
            out = call(pl.Buffered(1))   # single-buffer the constant-index operands
        except Exception:
            out = call(None)

    return out.reshape(B, S, d_in)


# ---------------------------------------------------------------------------
# Self-test
# ---------------------------------------------------------------------------

def _reference(x, w1, b1, w2, b2, gamma, beta):
    """Pure-JAX reference with the same bf16-matmul / f32-accumulate recipe."""
    mean = jnp.mean(x, axis=-1, keepdims=True)
    var = jnp.mean((x - mean) ** 2, axis=-1, keepdims=True)
    xn = (x - mean) * lax.rsqrt(var + 1e-6) * gamma + beta
    h = jnp.maximum(
        jnp.dot(xn.astype(jnp.bfloat16), w1.astype(jnp.bfloat16),
                preferred_element_type=jnp.float32) + b1, 0.0)
    return (jnp.dot(h.astype(jnp.bfloat16), w2.astype(jnp.bfloat16),
                    preferred_element_type=jnp.float32) + b2 + x)


def _make_params(key, d_in, d_hid):
    k1, kb1, k2, kb2 = jax.random.split(key, 4)
    w1 = jax.random.normal(k1, (d_in, d_hid), dtype=jnp.float32) * 0.05
    b1 = jax.random.normal(kb1, (d_hid,), dtype=jnp.float32) * 0.05
    w2 = jax.random.normal(k2, (d_hid, d_in), dtype=jnp.float32) * 0.05
    b2 = jax.random.normal(kb2, (d_in,), dtype=jnp.float32) * 0.05
    gamma = jnp.ones((d_in,), dtype=jnp.float32)
    beta = jnp.zeros((d_in,), dtype=jnp.float32)
    return w1, b1, w2, b2, gamma, beta


if __name__ == "__main__":
    key = jax.random.PRNGKey(0)
    kx1, kp1, kx2, kp2, kx3 = jax.random.split(key, 5)

    # ---- Test 1: single-pass (resident-weights) path -------------------------
    B, S, d_in, d_hid = 2, 8, 32, 64
    x = jax.random.normal(kx1, (B, S, d_in), dtype=jnp.float32)
    w1, b1, w2, b2, gamma, beta = _make_params(kp1, d_in, d_hid)
    # Pre-cast weights to bf16 once ("parameter-init time"), not per call.
    w1_bf, w2_bf = w1.astype(jnp.bfloat16), w2.astype(jnp.bfloat16)

    out = positionwise_feed_forward(x, w1_bf, b1, w2_bf, b2, gamma, beta)
    out = jax.block_until_ready(out)
    ref = _reference(x, w1, b1, w2, b2, gamma, beta)
    assert jnp.allclose(out, ref, atol=2e-2, rtol=2e-2), "single-pass mismatch"

    # ---- Test 2: weight-streaming path (forced d_hid tiling) -----------------
    d_hid2 = 256
    x2 = jax.random.normal(kx2, (B, S, d_in), dtype=jnp.float32)
    w1b, b1b, w2b, b2b, gammab, betab = _make_params(kp2, d_in, d_hid2)
    out2 = positionwise_feed_forward(
        x2, w1b.astype(jnp.bfloat16), b1b, w2b.astype(jnp.bfloat16), b2b,
        gammab, betab, force_hid_tile=128)
    out2 = jax.block_until_ready(out2)
    ref2 = _reference(x2, w1b, b1b, w2b, b2b, gammab, betab)
    assert jnp.allclose(out2, ref2, atol=2e-2, rtol=2e-2), "streaming mismatch"

    # ---- Test 3: partial last row block (M not a multiple of the row tile) ---
    x3 = jax.random.normal(kx3, (2, 12, d_in), dtype=jnp.float32)   # M = 24, tm = 16
    out3 = positionwise_feed_forward(x3, w1_bf, b1, w2_bf, b2, gamma, beta, tm=16)
    out3 = jax.block_until_ready(out3)
    ref3 = _reference(x3, w1, b1, w2, b2, gamma, beta)
    assert jnp.allclose(out3, ref3, atol=2e-2, rtol=2e-2), "partial-block mismatch"

    print("KERNEL_OK")
</pallas_src>

<mosaic_0001>
module attributes {stable_mosaic.version = 11 : i64} {
  func.func @_ffn_kernel(%arg0: i32, %arg1: memref<16x32xf32, #tpu.memory_space<vmem>>, %arg2: memref<32x64xbf16, #tpu.memory_space<vmem>>, %arg3: memref<1x64xf32, #tpu.memory_space<vmem>>, %arg4: memref<64x32xbf16, #tpu.memory_space<vmem>>, %arg5: memref<1x32xf32, #tpu.memory_space<vmem>>, %arg6: memref<1x32xf32, #tpu.memory_space<vmem>>, %arg7: memref<1x32xf32, #tpu.memory_space<vmem>>, %arg8: memref<16x32xf32, #tpu.memory_space<vmem>>) attributes {dimension_semantics = [#tpu.dimension_semantics<parallel>], iteration_bounds = array<i64: 1>, scalar_prefetch = 0 : i64, scratch_operands = 0 : i64, tpu.core_type = #tpu.core_type<tc>, window_params = [{transform_indices = @transform_0, window_bounds = array<i64: 16, 32>}, {pipeline_mode = #tpu.pipeline_mode<synchronous>, transform_indices = @transform_1, window_bounds = array<i64: 32, 64>}, {pipeline_mode = #tpu.pipeline_mode<synchronous>, transform_indices = @transform_2, window_bounds = array<i64: 1, 64>}, {pipeline_mode = #tpu.pipeline_mode<synchronous>, transform_indices = @transform_3, window_bounds = array<i64: 64, 32>}, {pipeline_mode = #tpu.pipeline_mode<synchronous>, transform_indices = @transform_4, window_bounds = array<i64: 1, 32>}, {pipeline_mode = #tpu.pipeline_mode<synchronous>, transform_indices = @transform_5, window_bounds = array<i64: 1, 32>}, {pipeline_mode = #tpu.pipeline_mode<synchronous>, transform_indices = @transform_6, window_bounds = array<i64: 1, 32>}, {transform_indices = @transform_7, window_bounds = array<i64: 16, 32>}]} {
    %c0 = arith.constant 0 : index
    %c0_0 = arith.constant 0 : index
    %0 = vector.load %arg6[%c0, %c0_0] : memref<1x32xf32, #tpu.memory_space<vmem>>, vector<1x32xf32>
    %c0_1 = arith.constant 0 : index
    %c0_2 = arith.constant 0 : index
    %1 = vector.load %arg7[%c0_1, %c0_2] : memref<1x32xf32, #tpu.memory_space<vmem>>, vector<1x32xf32>
    %c0_3 = arith.constant 0 : index
    %c0_4 = arith.constant 0 : index
    %2 = vector.load %arg3[%c0_3, %c0_4] : memref<1x64xf32, #tpu.memory_space<vmem>>, vector<1x64xf32>
    %c0_5 = arith.constant 0 : index
    %c0_6 = arith.constant 0 : index
    %3 = vector.load %arg5[%c0_5, %c0_6] : memref<1x32xf32, #tpu.memory_space<vmem>>, vector<1x32xf32>
    %c0_7 = arith.constant 0 : index
    %c0_8 = arith.constant 0 : index
    %4 = vector.load %arg1[%c0_7, %c0_8] : memref<16x32xf32, #tpu.memory_space<vmem>>, vector<8x32xf32>
    %cst = arith.constant dense<0.000000e+00> : vector<8xf32>
    %5 = vector.multi_reduction <add>, %4, %cst [1] : vector<8x32xf32> to vector<8xf32>
    %6 = vector.shape_cast %5 : vector<8xf32> to vector<8x1xf32>
    %cst_9 = arith.constant 3.200000e+01 : f32
    %7 = vector.broadcast %cst_9 : f32 to vector<8x1xf32>
    %8 = arith.divf %6, %7 : vector<8x1xf32>
    %9 = vector.broadcast %8 : vector<8x1xf32> to vector<8x32xf32>
    %10 = arith.subf %4, %9 : vector<8x32xf32>
    %11 = arith.mulf %10, %10 : vector<8x32xf32>
    %cst_10 = arith.constant dense<0.000000e+00> : vector<8xf32>
    %12 = vector.multi_reduction <add>, %11, %cst_10 [1] : vector<8x32xf32> to vector<8xf32>
    %13 = vector.shape_cast %12 : vector<8xf32> to vector<8x1xf32>
    %cst_11 = arith.constant 3.200000e+01 : f32
    %14 = vector.broadcast %cst_11 : f32 to vector<8x1xf32>
    %15 = arith.divf %13, %14 : vector<8x1xf32>
    %cst_12 = arith.constant 9.99999997E-7 : f32
    %16 = vector.broadcast %cst_12 : f32 to vector<8x1xf32>
    %17 = arith.addf %15, %16 : vector<8x1xf32>
    %18 = math.rsqrt %17 : vector<8x1xf32>
    %19 = vector.broadcast %18 : vector<8x1xf32> to vector<8x32xf32>
    %20 = arith.mulf %10, %19 : vector<8x32xf32>
    %21 = vector.broadcast %0 : vector<1x32xf32> to vector<8x32xf32>
    %22 = arith.mulf %20, %21 : vector<8x32xf32>
    %23 = vector.broadcast %1 : vector<1x32xf32> to vector<8x32xf32>
    %24 = arith.addf %22, %23 : vector<8x32xf32>
    %25 = arith.truncf %24 : vector<8x32xf32> to vector<8x32xbf16>
    %c0_13 = arith.constant 0 : index
    %c0_14 = arith.constant 0 : index
    %26 = vector.load %arg2[%c0_13, %c0_14] : memref<32x64xbf16, #tpu.memory_space<vmem>>, vector<32x64xbf16>
    %cst_15 = arith.constant dense<0.000000e+00> : vector<8x64xf32>
    %27 = tpu.matmul %25, %26, %cst_15 {dimension_numbers = #tpu.dot_dimension_numbers<[1], [0], [0], [1], [0, 0, 1, 1], [], []>} : vector<8x32xbf16>, vector<32x64xbf16>, vector<8x64xf32> -> vector<8x64xf32>
    %28 = vector.broadcast %2 : vector<1x64xf32> to vector<8x64xf32>
    %29 = arith.addf %27, %28 : vector<8x64xf32>
    %cst_16 = arith.constant 0.000000e+00 : f32
    %30 = vector.broadcast %cst_16 : f32 to vector<8x64xf32>
    %31 = arith.maximumf %29, %30 : vector<8x64xf32>
    %32 = arith.truncf %31 : vector<8x64xf32> to vector<8x64xbf16>
    %c0_17 = arith.constant 0 : index
    %c0_18 = arith.constant 0 : index
    %33 = vector.load %arg4[%c0_17, %c0_18] : memref<64x32xbf16, #tpu.memory_space<vmem>>, vector<64x32xbf16>
    %cst_19 = arith.constant dense<0.000000e+00> : vector<8x32xf32>
    %34 = tpu.matmul %32, %33, %cst_19 {dimension_numbers = #tpu.dot_dimension_numbers<[1], [0], [0], [1], [0, 0, 1, 1], [], []>} : vector<8x64xbf16>, vector<64x32xbf16>, vector<8x32xf32> -> vector<8x32xf32>
    %35 = vector.broadcast %3 : vector<1x32xf32> to vector<8x32xf32>
    %36 = arith.addf %34, %35 : vector<8x32xf32>
    %37 = arith.addf %36, %4 : vector<8x32xf32>
    %c0_20 = arith.constant 0 : index
    %c0_21 = arith.constant 0 : index
    %38 = vector.load %arg8[%c0_20, %c0_21] : memref<16x32xf32, #tpu.memory_space<vmem>>, vector<8x32xf32>
    tpu.vector_store %arg8[%c0_20, %c0_21], %37 {strides = array<i32>} : memref<16x32xf32, #tpu.memory_space<vmem>>, vector<8x32xf32>,
    %c8 = arith.constant 8 : index
    %c0_22 = arith.constant 0 : index
    %39 = vector.load %arg1[%c8, %c0_22] : memref<16x32xf32, #tpu.memory_space<vmem>>, vector<8x32xf32>
    %cst_23 = arith.constant dense<0.000000e+00> : vector<8xf32>
    %40 = vector.multi_reduction <add>, %39, %cst_23 [1] : vector<8x32xf32> to vector<8xf32>
    %41 = vector.shape_cast %40 : vector<8xf32> to vector<8x1xf32>
    %cst_24 = arith.constant 3.200000e+01 : f32
    %42 = vector.broadcast %cst_24 : f32 to vector<8x1xf32>
    %43 = arith.divf %41, %42 : vector<8x1xf32>
    %44 = vector.broadcast %43 : vector<8x1xf32> to vector<8x32xf32>
    %45 = arith.subf %39, %44 : vector<8x32xf32>
    %46 = arith.mulf %45, %45 : vector<8x32xf32>
    %cst_25 = arith.constant dense<0.000000e+00> : vector<8xf32>
    %47 = vector.multi_reduction <add>, %46, %cst_25 [1] : vector<8x32xf32> to vector<8xf32>
    %48 = vector.shape_cast %47 : vector<8xf32> to vector<8x1xf32>
    %cst_26 = arith.constant 3.200000e+01 : f32
    %49 = vector.broadcast %cst_26 : f32 to vector<8x1xf32>
    %50 = arith.divf %48, %49 : vector<8x1xf32>
    %cst_27 = arith.constant 9.99999997E-7 : f32
    %51 = vector.broadcast %cst_27 : f32 to vector<8x1xf32>
    %52 = arith.addf %50, %51 : vector<8x1xf32>
    %53 = math.rsqrt %52 : vector<8x1xf32>
    %54 = vector.broadcast %53 : vector<8x1xf32> to vector<8x32xf32>
    %55 = arith.mulf %45, %54 : vector<8x32xf32>
    %56 = vector.broadcast %0 : vector<1x32xf32> to vector<8x32xf32>
    %57 = arith.mulf %55, %56 : vector<8x32xf32>
    %58 = vector.broadcast %1 : vector<1x32xf32> to vector<8x32xf32>
    %59 = arith.addf %57, %58 : vector<8x32xf32>
    %60 = arith.truncf %59 : vector<8x32xf32> to vector<8x32xbf16>
    %c0_28 = arith.constant 0 : index
    %c0_29 = arith.constant 0 : index
    %61 = vector.load %arg2[%c0_28, %c0_29] : memref<32x64xbf16, #tpu.memory_space<vmem>>, vector<32x64xbf16>
    %cst_30 = arith.constant dense<0.000000e+00> : vector<8x64xf32>
    %62 = tpu.matmul %60, %61, %cst_30 {dimension_numbers = #tpu.dot_dimension_numbers<[1], [0], [0], [1], [0, 0, 1, 1], [], []>} : vector<8x32xbf16>, vector<32x64xbf16>, vector<8x64xf32> -> vector<8x64xf32>
    %63 = vector.broadcast %2 : vector<1x64xf32> to vector<8x64xf32>
    %64 = arith.addf %62, %63 : vector<8x64xf32>
    %cst_31 = arith.constant 0.000000e+00 : f32
    %65 = vector.broadcast %cst_31 : f32 to vector<8x64xf32>
    %66 = arith.maximumf %64, %65 : vector<8x64xf32>
    %67 = arith.truncf %66 : vector<8x64xf32> to vector<8x64xbf16>
    %c0_32 = arith.constant 0 : index
    %c0_33 = arith.constant 0 : index
    %68 = vector.load %arg4[%c0_32, %c0_33] : memref<64x32xbf16, #tpu.memory_space<vmem>>, vector<64x32xbf16>
    %cst_34 = arith.constant dense<0.000000e+00> : vector<8x32xf32>
    %69 = tpu.matmul %67, %68, %cst_34 {dimension_numbers = #tpu.dot_dimension_numbers<[1], [0], [0], [1], [0, 0, 1, 1], [], []>} : vector<8x64xbf16>, vector<64x32xbf16>, vector<8x32xf32> -> vector<8x32xf32>
    %70 = vector.broadcast %3 : vector<1x32xf32> to vector<8x32xf32>
    %71 = arith.addf %69, %70 : vector<8x32xf32>
    %72 = arith.addf %71, %39 : vector<8x32xf32>
    %c8_35 = arith.constant 8 : index
    %c0_36 = arith.constant 0 : index
    %73 = vector.load %arg8[%c8_35, %c0_36] : memref<16x32xf32, #tpu.memory_space<vmem>>, vector<8x32xf32>
    tpu.vector_store %arg8[%c8_35, %c0_36], %72 {strides = array<i32>} : memref<16x32xf32, #tpu.memory_space<vmem>>, vector<8x32xf32>,
    return
  }
  func.func @transform_0(%arg0: i32) -> (i32, i32) {
    %c0_i32 = arith.constant 0 : i32
    %c0_i32_0 = arith.constant 0 : i32
    return %arg0, %c0_i32 : i32, i32
  }
  func.func @transform_1(%arg0: i32) -> (i32, i32) {
    %c0_i32 = arith.constant 0 : i32
    %c0_i32_0 = arith.constant 0 : i32
    %c0_i32_1 = arith.constant 0 : i32
    return %c0_i32, %c0_i32_0 : i32, i32
  }
  func.func @transform_2(%arg0: i32) -> (i32, i32) {
    %c0_i32 = arith.constant 0 : i32
    %c0_i32_0 = arith.constant 0 : i32
    %c0_i32_1 = arith.constant 0 : i32
    return %c0_i32, %c0_i32_0 : i32, i32
  }
  func.func @transform_3(%arg0: i32) -> (i32, i32) {
    %c0_i32 = arith.constant 0 : i32
    %c0_i32_0 = arith.constant 0 : i32
    %c0_i32_1 = arith.constant 0 : i32
    return %c0_i32, %c0_i32_0 : i32, i32
  }
  func.func @transform_4(%arg0: i32) -> (i32, i32) {
    %c0_i32 = arith.constant 0 : i32
    %c0_i32_0 = arith.constant 0 : i32
    %c0_i32_1 = arith.constant 0 : i32
    return %c0_i32, %c0_i32_0 : i32, i32
  }
  func.func @transform_5(%arg0: i32) -> (i32, i32) {
    %c0_i32 = arith.constant 0 : i32
    %c0_i32_0 = arith.constant 0 : i32
    %c0_i32_1 = arith.constant 0 : i32
    return %c0_i32, %c0_i32_0 : i32, i32
  }
  func.func @transform_6(%arg0: i32) -> (i32, i32) {
    %c0_i32 = arith.constant 0 : i32
    %c0_i32_0 = arith.constant 0 : i32
    %c0_i32_1 = arith.constant 0 : i32
    return %c0_i32, %c0_i32_0 : i32, i32
  }
  func.func @transform_7(%arg0: i32) -> (i32, i32) {
    %c0_i32 = arith.constant 0 : i32
    %c0_i32_0 = arith.constant 0 : i32
    return %arg0, %c0_i32 : i32, i32
  }
}

module attributes {stable_mosaic.version = 11 : i64} {
  func.func @_ffn_kernel(%arg0: i32, %arg1: memref<16x32xf32, #tpu.memory_space<vmem>>, %arg2: memref<32x64xbf16, #tpu.memory_space<vmem>>, %arg3: memref<1x64xf32, #tpu.memory_space<vmem>>, %arg4: memref<64x32xbf16, #tpu.memory_space<vmem>>, %arg5: memref<1x32xf32, #tpu.memory_space<vmem>>, %arg6: memref<1x32xf32, #tpu.memory_space<vmem>>, %arg7: memref<1x32xf32, #tpu.memory_space<vmem>>, %arg8: memref<16x32xf32, #tpu.memory_space<vmem>>) attributes {dimension_semantics = [#tpu.dimension_semantics<parallel>], iteration_bounds = array<i64: 1>, scalar_prefetch = 0 : i64, scratch_operands = 0 : i64, tpu.core_type = #tpu.core_type<tc>, window_params = [{transform_indices = @transform_0, window_bounds = array<i64: 16, 32>}, {pipeline_mode = #tpu.pipeline_mode<synchronous>, transform_indices = @transform_1, window_bounds = array<i64: 32, 64>}, {pipeline_mode = #tpu.pipeline_mode<synchronous>, transform_indices = @transform_2, window_bounds = array<i64: 1, 64>}, {pipeline_mode = #tpu.pipeline_mode<synchronous>, transform_indices = @transform_3, window_bounds = array<i64: 64, 32>}, {pipeline_mode = #tpu.pipeline_mode<synchronous>, transform_indices = @transform_4, window_bounds = array<i64: 1, 32>}, {pipeline_mode = #tpu.pipeline_mode<synchronous>, transform_indices = @transform_5, window_bounds = array<i64: 1, 32>}, {pipeline_mode = #tpu.pipeline_mode<synchronous>, transform_indices = @transform_6, window_bounds = array<i64: 1, 32>}, {transform_indices = @transform_7, window_bounds = array<i64: 16, 32>}]} {
    %c0 = arith.constant 0 : index
    %c0_0 = arith.constant 0 : index
    %0 = vector.load %arg6[%c0, %c0_0] : memref<1x32xf32, #tpu.memory_space<vmem>>, vector<1x32xf32>
    %c0_1 = arith.constant 0 : index
    %c0_2 = arith.constant 0 : index
    %1 = vector.load %arg7[%c0_1, %c0_2] : memref<1x32xf32, #tpu.memory_space<vmem>>, vector<1x32xf32>
    %c0_3 = arith.constant 0 : index
    %c0_4 = arith.constant 0 : index
    %2 = vector.load %arg3[%c0_3, %c0_4] : memref<1x64xf32, #tpu.memory_space<vmem>>, vector<1x64xf32>
    %c0_5 = arith.constant 0 : index
    %c0_6 = arith.constant 0 : index
    %3 = vector.load %arg5[%c0_5, %c0_6] : memref<1x32xf32, #tpu.memory_space<vmem>>, vector<1x32xf32>
    %c0_7 = arith.constant 0 : index
    %c0_8 = arith.constant 0 : index
    %4 = vector.load %arg1[%c0_7, %c0_8] : memref<16x32xf32, #tpu.memory_space<vmem>>, vector<8x32xf32>
    %cst = arith.constant dense<0.000000e+00> : vector<8xf32>
    %5 = vector.multi_reduction <add>, %4, %cst [1] : vector<8x32xf32> to vector<8xf32>
    %6 = vector.shape_cast %5 : vector<8xf32> to vector<8x1xf32>
    %cst_9 = arith.constant 3.200000e+01 : f32
    %7 = vector.broadcast %cst_9 : f32 to vector<8x1xf32>
    %8 = arith.divf %6, %7 : vector<8x1xf32>
    %9 = vector.broadcast %8 : vector<8x1xf32> to vector<8x32xf32>
    %10 = arith.subf %4, %9 : vector<8x32xf32>
    %11 = arith.mulf %10, %10 : vector<8x32xf32>
    %cst_10 = arith.constant dense<0.000000e+00> : vector<8xf32>
    %12 = vector.multi_reduction <add>, %11, %cst_10 [1] : vector<8x32xf32> to vector<8xf32>
    %13 = vector.shape_cast %12 : vector<8xf32> to vector<8x1xf32>
    %cst_11 = arith.constant 3.200000e+01 : f32
    %14 = vector.broadcast %cst_11 : f32 to vector<8x1xf32>
    %15 = arith.divf %13, %14 : vector<8x1xf32>
    %cst_12 = arith.constant 9.99999997E-7 : f32
    %16 = vector.broadcast %cst_12 : f32 to vector<8x1xf32>
    %17 = arith.addf %15, %16 : vector<8x1xf32>
    %18 = math.rsqrt %17 : vector<8x1xf32>
    %19 = vector.broadcast %18 : vector<8x1xf32> to vector<8x32xf32>
    %20 = arith.mulf %10, %19 : vector<8x32xf32>
    %21 = vector.broadcast %0 : vector<1x32xf32> to vector<8x32xf32>
    %22 = arith.mulf %20, %21 : vector<8x32xf32>
    %23 = vector.broadcast %1 : vector<1x32xf32> to vector<8x32xf32>
    %24 = arith.addf %22, %23 : vector<8x32xf32>
    %25 = arith.truncf %24 : vector<8x32xf32> to vector<8x32xbf16>
    %c0_13 = arith.constant 0 : index
    %c0_14 = arith.constant 0 : index
    %26 = vector.load %arg2[%c0_13, %c0_14] : memref<32x64xbf16, #tpu.memory_space<vmem>>, vector<32x64xbf16>
    %cst_15 = arith.constant dense<0.000000e+00> : vector<8x64xf32>
    %27 = tpu.matmul %25, %26, %cst_15 {dimension_numbers = #tpu.dot_dimension_numbers<[1], [0], [0], [1], [0, 0, 1, 1], [], []>} : vector<8x32xbf16>, vector<32x64xbf16>, vector<8x64xf32> -> vector<8x64xf32>
    %28 = vector.broadcast %2 : vector<1x64xf32> to vector<8x64xf32>
    %29 = arith.addf %27, %28 : vector<8x64xf32>
    %cst_16 = arith.constant 0.000000e+00 : f32
    %30 = vector.broadcast %cst_16 : f32 to vector<8x64xf32>
    %31 = arith.maximumf %29, %30 : vector<8x64xf32>
    %32 = arith.truncf %31 : vector<8x64xf32> to vector<8x64xbf16>
    %c0_17 = arith.constant 0 : index
    %c0_18 = arith.constant 0 : index
    %33 = vector.load %arg4[%c0_17, %c0_18] : memref<64x32xbf16, #tpu.memory_space<vmem>>, vector<64x32xbf16>
    %cst_19 = arith.constant dense<0.000000e+00> : vector<8x32xf32>
    %34 = tpu.matmul %32, %33, %cst_19 {dimension_numbers = #tpu.dot_dimension_numbers<[1], [0], [0], [1], [0, 0, 1, 1], [], []>} : vector<8x64xbf16>, vector<64x32xbf16>, vector<8x32xf32> -> vector<8x32xf32>
    %35 = vector.broadcast %3 : vector<1x32xf32> to vector<8x32xf32>
    %36 = arith.addf %34, %35 : vector<8x32xf32>
    %37 = arith.addf %36, %4 : vector<8x32xf32>
    %c0_20 = arith.constant 0 : index
    %c0_21 = arith.constant 0 : index
    %38 = vector.load %arg8[%c0_20, %c0_21] : memref<16x32xf32, #tpu.memory_space<vmem>>, vector<8x32xf32>
    tpu.vector_store %arg8[%c0_20, %c0_21], %37 {strides = array<i32>} : memref<16x32xf32, #tpu.memory_space<vmem>>, vector<8x32xf32>,
    %c8 = arith.constant 8 : index
    %c0_22 = arith.constant 0 : index
    %39 = vector.load %arg1[%c8, %c0_22] : memref<16x32xf32, #tpu.memory_space<vmem>>, vector<8x32xf32>
    %cst_23 = arith.constant dense<0.000000e+00> : vector<8xf32>
    %40 = vector.multi_reduction <add>, %39, %cst_23 [1] : vector<8x32xf32> to vector<8xf32>
    %41 = vector.shape_cast %40 : vector<8xf32> to vector<8x1xf32>
    %cst_24 = arith.constant 3.200000e+01 : f32
    %42 = vector.broadcast %cst_24 : f32 to vector<8x1xf32>
    %43 = arith.divf %41, %42 : vector<8x1xf32>
    %44 = vector.broadcast %43 : vector<8x1xf32> to vector<8x32xf32>
    %45 = arith.subf %39, %44 : vector<8x32xf32>
    %46 = arith.mulf %45, %45 : vector<8x32xf32>
    %cst_25 = arith.constant dense<0.000000e+00> : vector<8xf32>
    %47 = vector.multi_reduction <add>, %46, %cst_25 [1] : vector<8x32xf32> to vector<8xf32>
    %48 = vector.shape_cast %47 : vector<8xf32> to vector<8x1xf32>
    %cst_26 = arith.constant 3.200000e+01 : f32
    %49 = vector.broadcast %cst_26 : f32 to vector<8x1xf32>
    %50 = arith.divf %48, %49 : vector<8x1xf32>
    %cst_27 = arith.constant 9.99999997E-7 : f32
    %51 = vector.broadcast %cst_27 : f32 to vector<8x1xf32>
    %52 = arith.addf %50, %51 : vector<8x1xf32>
    %53 = math.rsqrt %52 : vector<8x1xf32>
    %54 = vector.broadcast %53 : vector<8x1xf32> to vector<8x32xf32>
    %55 = arith.mulf %45, %54 : vector<8x32xf32>
    %56 = vector.broadcast %0 : vector<1x32xf32> to vector<8x32xf32>
    %57 = arith.mulf %55, %56 : vector<8x32xf32>
    %58 = vector.broadcast %1 : vector<1x32xf32> to vector<8x32xf32>
    %59 = arith.addf %57, %58 : vector<8x32xf32>
    %60 = arith.truncf %59 : vector<8x32xf32> to vector<8x32xbf16>
    %c0_28 = arith.constant 0 : index
    %c0_29 = arith.constant 0 : index
    %61 = vector.load %arg2[%c0_28, %c0_29] : memref<32x64xbf16, #tpu.memory_space<vmem>>, vector<32x64xbf16>
    %cst_30 = arith.constant dense<0.000000e+00> : vector<8x64xf32>
    %62 = tpu.matmul %60, %61, %cst_30 {dimension_numbers = #tpu.dot_dimension_numbers<[1], [0], [0], [1], [0, 0, 1, 1], [], []>} : vector<8x32xbf16>, vector<32x64xbf16>, vector<8x64xf32> -> vector<8x64xf32>
    %63 = vector.broadcast %2 : vector<1x64xf32> to vector<8x64xf32>
    %64 = arith.addf %62, %63 : vector<8x64xf32>
    %cst_31 = arith.constant 0.000000e+00 : f32
    %65 = vector.broadcast %cst_31 : f32 to vector<8x64xf32>
    %66 = arith.maximumf %64, %65 : vector<8x64xf32>
    %67 = arith.truncf %66 : vector<8x64xf32> to vector<8x64xbf16>
    %c0_32 = arith.constant 0 : index
    %c0_33 = arith.constant 0 : index
    %68 = vector.load %arg4[%c0_32, %c0_33] : memref<64x32xbf16, #tpu.memory_space<vmem>>, vector<64x32xbf16>
    %cst_34 = arith.constant dense<0.000000e+00> : vector<8x32xf32>
    %69 = tpu.matmul %67, %68, %cst_34 {dimension_numbers = #tpu.dot_dimension_numbers<[1], [0], [0], [1], [0, 0, 1, 1], [], []>} : vector<8x64xbf16>, vector<64x32xbf16>, vector<8x32xf32> -> vector<8x32xf32>
    %70 = vector.broadcast %3 : vector<1x32xf32> to vector<8x32xf32>
    %71 = arith.addf %69, %70 : vector<8x32xf32>
    %72 = arith.addf %71, %39 : vector<8x32xf32>
    %c8_35 = arith.constant 8 : index
    %c0_36 = arith.constant 0 : index
    %73 = vector.load %arg8[%c8_35, %c0_36] : memref<16x32xf32, #tpu.memory_space<vmem>>, vector<8x32xf32>
    tpu.vector_store %arg8[%c8_35, %c0_36], %72 {strides = array<i32>} : memref<16x32xf32, #tpu.memory_space<vmem>>, vector<8x32xf32>,
    return
  }
  func.func @transform_0(%arg0: i32) -> (i32, i32) {
    %c0_i32 = arith.constant 0 : i32
    %c0_i32_0 = arith.constant 0 : i32
    return %arg0, %c0_i32 : i32, i32
  }
  func.func @transform_1(%arg0: i32) -> (i32, i32) {
    %c0_i32 = arith.constant 0 : i32
    %c0_i32_0 = arith.constant 0 : i32
    %c0_i32_1 = arith.constant 0 : i32
    return %c0_i32, %c0_i32_0 : i32, i32
  }
  func.func @transform_2(%arg0: i32) -> (i32, i32) {
    %c0_i32 = arith.constant 0 : i32
    %c0_i32_0 = arith.constant 0 : i32
    %c0_i32_1 = arith.constant 0 : i32
    return %c0_i32, %c0_i32_0 : i32, i32
  }
  func.func @transform_3(%arg0: i32) -> (i32, i32) {
    %c0_i32 = arith.constant 0 : i32
    %c0_i32_0 = arith.constant 0 : i32
    %c0_i32_1 = arith.constant 0 : i32
    return %c0_i32, %c0_i32_0 : i32, i32
  }
  func.func @transform_4(%arg0: i32) -> (i32, i32) {
    %c0_i32 = arith.constant 0 : i32
    %c0_i32_0 = arith.constant 0 : i32
    %c0_i32_1 = arith.constant 0 : i32
    return %c0_i32, %c0_i32_0 : i32, i32
  }
  func.func @transform_5(%arg0: i32) -> (i32, i32) {
    %c0_i32 = arith.constant 0 : i32
    %c0_i32_0 = arith.constant 0 : i32
    %c0_i32_1 = arith.constant 0 : i32
    return %c0_i32, %c0_i32_0 : i32, i32
  }
  func.func @transform_6(%arg0: i32) -> (i32, i32) {
    %c0_i32 = arith.constant 0 : i32
    %c0_i32_0 = arith.constant 0 : i32
    %c0_i32_1 = arith.constant 0 : i32
    return %c0_i32, %c0_i32_0 : i32, i32
  }
  func.func @transform_7(%arg0: i32) -> (i32, i32) {
    %c0_i32 = arith.constant 0 : i32
    %c0_i32_0 = arith.constant 0 : i32
    return %arg0, %c0_i32 : i32, i32
  }
}

</mosaic_0001>

<llo_original>
// kernel: tpu_custom_call.1
$region0: #{tpu_custom_call.1}
  #allocation0 [shape = 'u32[]', space=smem, size = 0x4, offset = 0x4, fixed_abs, tag = 'smem constant byte address 0x4 - core index']
  #allocation1 [shape = 'u32[144,128]{1,0:T(1,128)}', space=vmem, size = 0x12000, scoped, tag = 'internal scratch']
  %s0 = inlined_call_operand.vmem [shape: f32[16,32], index: 0, kind: input, shape index: {}]
  %s1 = inlined_call_operand.vmem [shape: bf16[32,64], index: 1, kind: input, shape index: {}]
  %s2 = inlined_call_operand.vmem [shape: f32[1,64], index: 2, kind: input, shape index: {}]
  %s3 = inlined_call_operand.vmem [shape: bf16[64,32], index: 3, kind: input, shape index: {}]
  %s4 = inlined_call_operand.vmem [shape: f32[1,32], index: 4, kind: input, shape index: {}]
  %s5 = inlined_call_operand.vmem [shape: f32[1,32], index: 5, kind: input, shape index: {}]
  %s6 = inlined_call_operand.vmem [shape: f32[1,32], index: 6, kind: input, shape index: {}]
  %s7 = inlined_call_operand.hbm [shape: f32[16,32], index: 7, kind: output, shape index: {}]
  %s8 = sld [smem:[#allocation0]]
  $region38: #{tpu_custom_call.1} parent=0
    _
  %s10 = ssub.s32 1, %s8
  %s11 = scalar_select 0, %s10, %s8
  $region1: #{tpu_custom_call.1} parent=0
    #allocation2 [shape = 'u8[8192]{0}', space=vmem, size = 0x2000, scoped, tag = 'output window, operand 0, single buffered']
    #allocation3 [shape = 's32[1]{0}', space=sflag, size = 0x4, scoped, tag = 'scoped memory for tpu_custom_call.1']
    %12 = vsyncpa [#allocation3], 0
    // Predicated region
    $region2: #{tpu_custom_call.1} parent=1 // pred_check
      _
    $region3: #{tpu_custom_call.1} parent=1 // pred_check_branch
      %14 = sbr.rel (0) target = $region5
    $region4: #{tpu_custom_call.1} parent=1 // pred_region
      _
    $region5: #{tpu_custom_call.1} parent=1 // pred_fallthru
      _
    // Predicated region
    $region6: #{tpu_custom_call.1} parent=1 // pred_check
      _
    $region7: #{tpu_custom_call.1} parent=1 // pred_check_branch
      %16 = sbr.rel (0) target = $region9
    $region8: #{tpu_custom_call.1} parent=1 // pred_region
      _
    $region9: #{tpu_custom_call.1} parent=1 // pred_fallthru
      _
    // Predicated region
    $region10: #{tpu_custom_call.1} parent=1 // pred_check
      _
    $region11: #{tpu_custom_call.1} parent=1 // pred_check_branch
      %18 = sbr.rel (0) target = $region13
    $region12: #{tpu_custom_call.1} parent=1 // pred_region
      _
    $region13: #{tpu_custom_call.1} parent=1 // pred_fallthru
      _
    // Predicated region
    $region14: #{tpu_custom_call.1} parent=1 // pred_check
      _
    $region15: #{tpu_custom_call.1} parent=1 // pred_check_branch
      %20 = sbr.rel (0) target = $region17
    $region16: #{tpu_custom_call.1} parent=1 // pred_region
      _
    $region17: #{tpu_custom_call.1} parent=1 // pred_fallthru
      _
    // Predicated region
    $region18: #{tpu_custom_call.1} parent=1 // pred_check
      _
    $region19: #{tpu_custom_call.1} parent=1 // pred_check_branch
      %22 = sbr.rel (0) target = $region21
    $region20: #{tpu_custom_call.1} parent=1 // pred_region
      _
    $region21: #{tpu_custom_call.1} parent=1 // pred_fallthru
      _
    // Predicated region
    $region22: #{tpu_custom_call.1} parent=1 // pred_check
      _
    $region23: #{tpu_custom_call.1} parent=1 // pred_check_branch
      %24 = sbr.rel (0) target = $region25
    $region24: #{tpu_custom_call.1} parent=1 // pred_region
      _
    $region25: #{tpu_custom_call.1} parent=1 // pred_fallthru
      _
    // Predicated region
    $region26: #{tpu_custom_call.1} parent=1 // pred_check
      _
    $region27: #{tpu_custom_call.1} parent=1 // pred_check_branch
      %26 = sbr.rel (0) target = $region29
    $region28: #{tpu_custom_call.1} parent=1 // pred_region
      _
    $region29: #{tpu_custom_call.1} parent=1 // pred_fallthru
      _
    %v28 = vld [vmem:[%s5] sm:$0x1]
    %v29 = vld [vmem:[%s6] sm:$0x1]
    %v30 = vld [vmem:[%s2] sm:$0x1]
    %v31 = vld [vmem:[%s4] sm:$0x1]
    %v32 = vld [vmem:[%s0] sm:$0xff]
    %vm33 = vcmask 261120
    %v34 = vsel %vm33, %v32, 0.0
    %35 = vadd.xlane.f32.xlu0 %v34
    %v36 = vpop.xlane.xlu0 %35
    %v37 = vrcp.pop 32.0
    %v38 = vmul.f32 %v36, %v37
    %v39 = vsub.f32 %v32, %v38
    %v40 = vmul.f32 %v39, %v39
    %v41 = vsel %vm33, %v40, 0.0
    %42 = vadd.xlane.f32.xlu0 %v41
    %v43 = vpop.xlane.xlu0 %42
    %v44 = vmul.f32 %v43, %v37
    %v45 = vadd.f32 %v44, 1e-06
    %v46 = vrsqrt.pop %v45
    %v47 = vmul.f32 %v39, %v46
    %v49 = vlaneseq
    %v50 = vshrl.u32 %v49, 7
    %v51 = vsub.s32 0, %v50
    %v52 = vrot.slane %v28, %v51
    %v54 = vmul.f32 %v47, %v52
    %v56 = vlaneseq
    %v57 = vshrl.u32 %v56, 7
    %v58 = vsub.s32 0, %v57
    %v59 = vrot.slane %v29, %v58
    %v61 = vadd.f32 %v54, %v59
    %v62 = vpack.c.bf16 %v61, %v61
    %v63 = vld [vmem:[%s1] sm:$0xf]
    %v64 = vld [vmem:[%s1 + $0x4] sm:$0xf]
    %v65 = vld [vmem:[%s1 + $0x8] sm:$0xf]
    %v66 = vld [vmem:[%s1 + $0xc] sm:$0xf]
    %v68 = vlaneseq
    %v69 = vshrl.u32 %v68, 7
    %v70 = vsub.s32 0, %v69
    %v71 = vrot.slane %v30, %v70
    %v77 = vunpack.c.l.b16 %v63
    %v78 = vunpack.c.l.b16 %v64
    %v79 = vunpack.c.l.b16 %v65
    %v80 = vunpack.c.l.b16 %v66
    %v81 = vpack.c.b16 %v78, %v77
    %v82 = vpack.c.b16 %v80, %v79
    %v86 = vsel %vm33, %v62, 0
    %88 = vmatprep.subr.bf16.mxu0 0
    %89 = vmatpush1.bf16.msra.mxu0 %v81
    %90 = vmatprep.subr.bf16.mxu0 0
    %91 = vmatpush1.bf16.msra.mxu0 %v82
    %92 = vmatprep.subr.bf16.mxu0 0
    %93 = vmatpush1.bf16.msra.mxu0 0
    %94 = vmatprep.subr.bf16.mxu0 0
    %95 = vmatpush1.bf16.msra.mxu0 0
    %96 = vmatprep.subr.bf16.mxu0 0
    %97 = vmatpush1.bf16.msra.mxu0 0
    %98 = vmatprep.subr.bf16.mxu0 0
    %99 = vmatpush1.bf16.msra.mxu0 0
    %100 = vmatprep.subr.bf16.mxu0 0
    %101 = vmatpush1.bf16.msra.mxu0 0
    %102 = vmatprep.subr.bf16.mxu0 0
    %103 = vmatpush1.bf16.msra.mxu0 0
    %104 = vmatprep.subr.bf16.mxu0 0
    %105 = vmatpush1.bf16.msra.mxu0 0
    %106 = vmatprep.subr.bf16.mxu0 0
    %107 = vmatpush1.bf16.msra.mxu0 0
    %108 = vmatprep.subr.bf16.mxu0 0
    %109 = vmatpush1.bf16.msra.mxu0 0
    %110 = vmatprep.subr.bf16.mxu0 0
    %111 = vmatpush1.bf16.msra.mxu0 0
    %112 = vmatprep.subr.bf16.mxu0 0
    %113 = vmatpush1.bf16.msra.mxu0 0
    %114 = vmatprep.subr.bf16.mxu0 0
    %115 = vmatpush1.bf16.msra.mxu0 0
    %116 = vmatprep.subr.bf16.mxu0 0
    %117 = vmatpush1.bf16.msra.mxu0 0
    %118 = vmatprep.subr.bf16.mxu0 0
    %119 = vmatpush1.bf16.msra.mxu0 0
    %120 = vmatprep.mubr.bf16.mxu0 0
    %121 = vmatmul.mubr.bf16.gmra.mrb[0].mxu0 %v86
    %v122 = vpop.f32.mrb[0].mxu0
    %v123 = vadd.f32 %v71, %v122
    %v124 = vpop.f32.mrb[0].mxu0
    %v125 = vpop.f32.mrb[0].mxu0
    %v126 = vpop.f32.mrb[0].mxu0
    %127 = vdwg.mxu0
    %v128 = vmax.f32 %v123, 0.0
    %v129 = vpack.c.bf16 %v128, %v128
    %v130 = vld [vmem:[%s3] sm:$0xf]
    %v131 = vld [vmem:[%s3 + $0x4] sm:$0xf]
    %v132 = vld [vmem:[%s3 + $0x8] sm:$0xf]
    %v133 = vld [vmem:[%s3 + $0xc] sm:$0xf]
    %v134 = vld [vmem:[%s3 + $0x10] sm:$0xf]
    %v135 = vld [vmem:[%s3 + $0x14] sm:$0xf]
    %v136 = vld [vmem:[%s3 + $0x18] sm:$0xf]
    %v137 = vld [vmem:[%s3 + $0x1c] sm:$0xf]
    %v139 = vlaneseq
    %v140 = vshrl.u32 %v139, 7
    %v141 = vsub.s32 0, %v140
    %v142 = vrot.slane %v31, %v141
    %v152 = vunpack.c.l.b16 %v130
    %v153 = vunpack.c.l.b16 %v131
    %v154 = vunpack.c.l.b16 %v132
    %v155 = vunpack.c.l.b16 %v133
    %v156 = vunpack.c.l.b16 %v134
    %v157 = vunpack.c.l.b16 %v135
    %v158 = vunpack.c.l.b16 %v136
    %v159 = vunpack.c.l.b16 %v137
    %v160 = vpack.c.b16 %v153, %v152
    %v161 = vpack.c.b16 %v155, %v154
    %v162 = vpack.c.b16 %v157, %v156
    %v163 = vpack.c.b16 %v159, %v158
    %vm168 = vcmask 523264
    %v170 = vsel %vm168, %v129, 0
    %172 = vmatprep.subr.bf16.mxu0 0
    %173 = vmatpush1.bf16.msra.mxu0 %v160
    %174 = vmatprep.subr.bf16.mxu0 0
    %175 = vmatpush1.bf16.msra.mxu0 %v161
    %176 = vmatprep.subr.bf16.mxu0 0
    %177 = vmatpush1.bf16.msra.mxu0 %v162
    %178 = vmatprep.subr.bf16.mxu0 0
    %179 = vmatpush1.bf16.msra.mxu0 %v163
    %180 = vmatprep.subr.bf16.mxu0 0
    %181 = vmatpush1.bf16.msra.mxu0 0
    %182 = vmatprep.subr.bf16.mxu0 0
    %183 = vmatpush1.bf16.msra.mxu0 0
    %184 = vmatprep.subr.bf16.mxu0 0
    %185 = vmatpush1.bf16.msra.mxu0 0
    %186 = vmatprep.subr.bf16.mxu0 0
    %187 = vmatpush1.bf16.msra.mxu0 0
    %188 = vmatprep.subr.bf16.mxu0 0
    %189 = vmatpush1.bf16.msra.mxu0 0
    %190 = vmatprep.subr.bf16.mxu0 0
    %191 = vmatpush1.bf16.msra.mxu0 0
    %192 = vmatprep.subr.bf16.mxu0 0
    %193 = vmatpush1.bf16.msra.mxu0 0
    %194 = vmatprep.subr.bf16.mxu0 0
    %195 = vmatpush1.bf16.msra.mxu0 0
    %196 = vmatprep.subr.bf16.mxu0 0
    %197 = vmatpush1.bf16.msra.mxu0 0
    %198 = vmatprep.subr.bf16.mxu0 0
    %199 = vmatpush1.bf16.msra.mxu0 0
    %200 = vmatprep.subr.bf16.mxu0 0
    %201 = vmatpush1.bf16.msra.mxu0 0
    %202 = vmatprep.subr.bf16.mxu0 0
    %203 = vmatpush1.bf16.msra.mxu0 0
    %204 = vmatprep.mubr.bf16.mxu0 0
    %205 = vmatmul.mubr.bf16.gmra.mrb[0].mxu0 %v170
    %v206 = vpop.f32.mrb[0].mxu0
    %v207 = vadd.f32 %v142, %v206
    %v208 = vpop.f32.mrb[0].mxu0
    %v209 = vpop.f32.mrb[0].mxu0
    %v210 = vpop.f32.mrb[0].mxu0
    %211 = vdwg.mxu0
    %v212 = vadd.f32 %v207, %v32
    %213 = vst.msk [vmem:[#allocation2] sm:$0xff] %vm33, %v212
    %v214 = vld [vmem:[%s0 + $0x8] sm:$0xff]
    %v215 = vsel %vm33, %v214, 0.0
    %216 = vadd.xlane.f32.xlu0 %v215
    %v217 = vpop.xlane.xlu0 %216
    %v218 = vmul.f32 %v217, %v37
    %v219 = vsub.f32 %v214, %v218
    %v220 = vmul.f32 %v219, %v219
    %v221 = vsel %vm33, %v220, 0.0
    %222 = vadd.xlane.f32.xlu0 %v221
    %v223 = vpop.xlane.xlu0 %222
    %v224 = vmul.f32 %v223, %v37
    %v225 = vadd.f32 %v224, 1e-06
    %v226 = vrsqrt.pop %v225
    %v227 = vmul.f32 %v219, %v226
    %v228 = vmul.f32 %v227, %v52
    %v229 = vadd.f32 %v228, %v59
    %v230 = vpack.c.bf16 %v229, %v229
    %v231 = vld [vmem:[%s1] sm:$0xf]
    %v232 = vld [vmem:[%s1 + $0x4] sm:$0xf]
    %v233 = vld [vmem:[%s1 + $0x8] sm:$0xf]
    %v234 = vld [vmem:[%s1 + $0xc] sm:$0xf]
    %v239 = vunpack.c.l.b16 %v231
    %v240 = vunpack.c.l.b16 %v232
    %v241 = vunpack.c.l.b16 %v233
    %v242 = vunpack.c.l.b16 %v234
    %v243 = vpack.c.b16 %v240, %v239
    %v244 = vpack.c.b16 %v242, %v241
    %v248 = vsel %vm33, %v230, 0
    %250 = vmatprep.subr.bf16.mxu0 0
    %251 = vmatpush1.bf16.msra.mxu0 %v243
    %252 = vmatprep.subr.bf16.mxu0 0
    %253 = vmatpush1.bf16.msra.mxu0 %v244
    %254 = vmatprep.subr.bf16.mxu0 0
    %255 = vmatpush1.bf16.msra.mxu0 0
    %256 = vmatprep.subr.bf16.mxu0 0
    %257 = vmatpush1.bf16.msra.mxu0 0
    %258 = vmatprep.subr.bf16.mxu0 0
    %259 = vmatpush1.bf16.msra.mxu0 0
    %260 = vmatprep.subr.bf16.mxu0 0
    %261 = vmatpush1.bf16.msra.mxu0 0
    %262 = vmatprep.subr.bf16.mxu0 0
    %263 = vmatpush1.bf16.msra.mxu0 0
    %264 = vmatprep.subr.bf16.mxu0 0
    %265 = vmatpush1.bf16.msra.mxu0 0
    %266 = vmatprep.subr.bf16.mxu0 0
    %267 = vmatpush1.bf16.msra.mxu0 0
    %268 = vmatprep.subr.bf16.mxu0 0
    %269 = vmatpush1.bf16.msra.mxu0 0
    %270 = vmatprep.subr.bf16.mxu0 0
    %271 = vmatpush1.bf16.msra.mxu0 0
    %272 = vmatprep.subr.bf16.mxu0 0
    %273 = vmatpush1.bf16.msra.mxu0 0
    %274 = vmatprep.subr.bf16.mxu0 0
    %275 = vmatpush1.bf16.msra.mxu0 0
    %276 = vmatprep.subr.bf16.mxu0 0
    %277 = vmatpush1.bf16.msra.mxu0 0
    %278 = vmatprep.subr.bf16.mxu0 0
    %279 = vmatpush1.bf16.msra.mxu0 0
    %280 = vmatprep.subr.bf16.mxu0 0
    %281 = vmatpush1.bf16.msra.mxu0 0
    %282 = vmatprep.mubr.bf16.mxu0 0
    %283 = vmatmul.mubr.bf16.gmra.mrb[0].mxu0 %v248
    %v284 = vpop.f32.mrb[0].mxu0
    %v285 = vadd.f32 %v71, %v284
    %v286 = vpop.f32.mrb[0].mxu0
    %v287 = vpop.f32.mrb[0].mxu0
    %v288 = vpop.f32.mrb[0].mxu0
    %289 = vdwg.mxu0
    %v290 = vmax.f32 %v285, 0.0
    %v291 = vpack.c.bf16 %v290, %v290
    %v292 = vld [vmem:[%s3] sm:$0xf]
    %v293 = vld [vmem:[%s3 + $0x4] sm:$0xf]
    %v294 = vld [vmem:[%s3 + $0x8] sm:$0xf]
    %v295 = vld [vmem:[%s3 + $0xc] sm:$0xf]
    %v296 = vld [vmem:[%s3 + $0x10] sm:$0xf]
    %v297 = vld [vmem:[%s3 + $0x14] sm:$0xf]
    %v298 = vld [vmem:[%s3 + $0x18] sm:$0xf]
    %v299 = vld [vmem:[%s3 + $0x1c] sm:$0xf]
    %v308 = vunpack.c.l.b16 %v292
    %v309 = vunpack.c.l.b16 %v293
    %v310 = vunpack.c.l.b16 %v294
    %v311 = vunpack.c.l.b16 %v295
    %v312 = vunpack.c.l.b16 %v296
    %v313 = vunpack.c.l.b16 %v297
    %v314 = vunpack.c.l.b16 %v298
    %v315 = vunpack.c.l.b16 %v299
    %v316 = vpack.c.b16 %v309, %v308
    %v317 = vpack.c.b16 %v311, %v310
    %v318 = vpack.c.b16 %v313, %v312
    %v319 = vpack.c.b16 %v315, %v314
    %v325 = vsel %vm168, %v291, 0
    %327 = vmatprep.subr.bf16.mxu0 0
    %328 = vmatpush1.bf16.msra.mxu0 %v316
    %329 = vmatprep.subr.bf16.mxu0 0
    %330 = vmatpush1.bf16.msra.mxu0 %v317
    %331 = vmatprep.subr.bf16.mxu0 0
    %332 = vmatpush1.bf16.msra.mxu0 %v318
    %333 = vmatprep.subr.bf16.mxu0 0
    %334 = vmatpush1.bf16.msra.mxu0 %v319
    %335 = vmatprep.subr.bf16.mxu0 0
    %336 = vmatpush1.bf16.msra.mxu0 0
    %337 = vmatprep.subr.bf16.mxu0 0
    %338 = vmatpush1.bf16.msra.mxu0 0
    %339 = vmatprep.subr.bf16.mxu0 0
    %340 = vmatpush1.bf16.msra.mxu0 0
    %341 = vmatprep.subr.bf16.mxu0 0
    %342 = vmatpush1.bf16.msra.mxu0 0
    %343 = vmatprep.subr.bf16.mxu0 0
    %344 = vmatpush1.bf16.msra.mxu0 0
    %345 = vmatprep.subr.bf16.mxu0 0
    %346 = vmatpush1.bf16.msra.mxu0 0
    %347 = vmatprep.subr.bf16.mxu0 0
    %348 = vmatpush1.bf16.msra.mxu0 0
    %349 = vmatprep.subr.bf16.mxu0 0
    %350 = vmatpush1.bf16.msra.mxu0 0
    %351 = vmatprep.subr.bf16.mxu0 0
    %352 = vmatpush1.bf16.msra.mxu0 0
    %353 = vmatprep.subr.bf16.mxu0 0
    %354 = vmatpush1.bf16.msra.mxu0 0
    %355 = vmatprep.subr.bf16.mxu0 0
    %356 = vmatpush1.bf16.msra.mxu0 0
    %357 = vmatprep.subr.bf16.mxu0 0
    %358 = vmatpush1.bf16.msra.mxu0 0
    %359 = vmatprep.mubr.bf16.mxu0 0
    %360 = vmatmul.mubr.bf16.gmra.mrb[0].mxu0 %v325
    %v361 = vpop.f32.mrb[0].mxu0
    %v362 = vadd.f32 %v142, %v361
    %v363 = vpop.f32.mrb[0].mxu0
    %v364 = vpop.f32.mrb[0].mxu0
    %v365 = vpop.f32.mrb[0].mxu0
    %366 = vdwg.mxu0
    %v367 = vadd.f32 %v362, %v214
    %368 = vst.msk [vmem:[#allocation2 + $0x8] sm:$0xff] %vm33, %v367
    // Predicated region
    $region30: #{tpu_custom_call.1} parent=1 // pred_check
      _
    $region31: #{tpu_custom_call.1} parent=1 // pred_check_branch
      %370 = sbr.rel (0) target = $region33
    $region32: #{tpu_custom_call.1} parent=1 // pred_region
      %s372 = ssub.s32 256, 256
      %373 = vsyncadd [#allocation3], %s372
      %s374 = sshll.u32 [#allocation2], 4
      %s375 = int_to_ptr.vmem [resolvable:$true] %s374
      %380 = dma.vmem_to_hbm [thread:$0]  %s375, 256, %s7, [#allocation3], 128, 128, 8
    $region33: #{tpu_custom_call.1} parent=1 // pred_fallthru
      _
    // Predicated region
    $region34: #{tpu_custom_call.1} parent=1 // pred_check
      _
    $region35: #{tpu_custom_call.1} parent=1 // pred_check_branch
      %382 = sbr.rel (0) target = $region37
    $region36: #{tpu_custom_call.1} parent=1 // pred_region
      %383 = dma.done [#allocation3], 256
    $region37: #{tpu_custom_call.1} parent=1 // pred_fallthru
      _
    %384 = vsyncpa [#allocation3], 1

// kernel: tpu_custom_call.1
$region0: #{tpu_custom_call.1}
  #allocation0 [shape = 'u32[]', space=smem, size = 0x4, offset = 0x4, fixed_abs, tag = 'smem constant byte address 0x4 - core index']
  #allocation1 [shape = 'u32[144,128]{1,0:T(1,128)}', space=vmem, size = 0x12000, scoped, tag = 'internal scratch']
  %s0 = inlined_call_operand.vmem [shape: f32[16,32], index: 0, kind: input, shape index: {}]
  %s1 = inlined_call_operand.vmem [shape: bf16[32,64], index: 1, kind: input, shape index: {}]
  %s2 = inlined_call_operand.vmem [shape: f32[1,64], index: 2, kind: input, shape index: {}]
  %s3 = inlined_call_operand.vmem [shape: bf16[64,32], index: 3, kind: input, shape index: {}]
  %s4 = inlined_call_operand.vmem [shape: f32[1,32], index: 4, kind: input, shape index: {}]
  %s5 = inlined_call_operand.vmem [shape: f32[1,32], index: 5, kind: input, shape index: {}]
  %s6 = inlined_call_operand.vmem [shape: f32[1,32], index: 6, kind: input, shape index: {}]
  %s7 = inlined_call_operand.hbm [shape: f32[16,32], index: 7, kind: output, shape index: {}]
  %s8 = sld [smem:[#allocation0]]
  $region38: #{tpu_custom_call.1} parent=0
    _
  %s10 = ssub.s32 1, %s8
  %s11 = scalar_select 0, %s10, %s8
  $region1: #{tpu_custom_call.1} parent=0
    #allocation2 [shape = 'u8[8192]{0}', space=vmem, size = 0x2000, scoped, tag = 'output window, operand 0, single buffered']
    #allocation3 [shape = 's32[1]{0}', space=sflag, size = 0x4, scoped, tag = 'scoped memory for tpu_custom_call.1']
    %12 = vsyncpa [#allocation3], 0
    // Predicated region
    $region2: #{tpu_custom_call.1} parent=1 // pred_check
      _
    $region3: #{tpu_custom_call.1} parent=1 // pred_check_branch
      %14 = sbr.rel (0) target = $region5
    $region4: #{tpu_custom_call.1} parent=1 // pred_region
      _
    $region5: #{tpu_custom_call.1} parent=1 // pred_fallthru
      _
    // Predicated region
    $region6: #{tpu_custom_call.1} parent=1 // pred_check
      _
    $region7: #{tpu_custom_call.1} parent=1 // pred_check_branch
      %16 = sbr.rel (0) target = $region9
    $region8: #{tpu_custom_call.1} parent=1 // pred_region
      _
    $region9: #{tpu_custom_call.1} parent=1 // pred_fallthru
      _
    // Predicated region
    $region10: #{tpu_custom_call.1} parent=1 // pred_check
      _
    $region11: #{tpu_custom_call.1} parent=1 // pred_check_branch
      %18 = sbr.rel (0) target = $region13
    $region12: #{tpu_custom_call.1} parent=1 // pred_region
      _
    $region13: #{tpu_custom_call.1} parent=1 // pred_fallthru
      _
    // Predicated region
    $region14: #{tpu_custom_call.1} parent=1 // pred_check
      _
    $region15: #{tpu_custom_call.1} parent=1 // pred_check_branch
      %20 = sbr.rel (0) target = $region17
    $region16: #{tpu_custom_call.1} parent=1 // pred_region
      _
    $region17: #{tpu_custom_call.1} parent=1 // pred_fallthru
      _
    // Predicated region
    $region18: #{tpu_custom_call.1} parent=1 // pred_check
      _
    $region19: #{tpu_custom_call.1} parent=1 // pred_check_branch
      %22 = sbr.rel (0) target = $region21
    $region20: #{tpu_custom_call.1} parent=1 // pred_region
      _
    $region21: #{tpu_custom_call.1} parent=1 // pred_fallthru
      _
    // Predicated region
    $region22: #{tpu_custom_call.1} parent=1 // pred_check
      _
    $region23: #{tpu_custom_call.1} parent=1 // pred_check_branch
      %24 = sbr.rel (0) target = $region25
    $region24: #{tpu_custom_call.1} parent=1 // pred_region
      _
    $region25: #{tpu_custom_call.1} parent=1 // pred_fallthru
      _
    // Predicated region
    $region26: #{tpu_custom_call.1} parent=1 // pred_check
      _
    $region27: #{tpu_custom_call.1} parent=1 // pred_check_branch
      %26 = sbr.rel (0) target = $region29
    $region28: #{tpu_custom_call.1} parent=1 // pred_region
      _
    $region29: #{tpu_custom_call.1} parent=1 // pred_fallthru
      _
    %v28 = vld [vmem:[%s5] sm:$0x1]
    %v29 = vld [vmem:[%s6] sm:$0x1]
    %v30 = vld [vmem:[%s2] sm:$0x1]
    %v31 = vld [vmem:[%s4] sm:$0x1]
    %v32 = vld [vmem:[%s0] sm:$0xff]
    %vm33 = vcmask 261120
    %v34 = vsel %vm33, %v32, 0.0
    %35 = vadd.xlane.f32.xlu0 %v34
    %v36 = vpop.xlane.xlu0 %35
    %v37 = vrcp.pop 32.0
    %v38 = vmul.f32 %v36, %v37
    %v39 = vsub.f32 %v32, %v38
    %v40 = vmul.f32 %v39, %v39
    %v41 = vsel %vm33, %v40, 0.0
    %42 = vadd.xlane.f32.xlu0 %v41
    %v43 = vpop.xlane.xlu0 %42
    %v44 = vmul.f32 %v43, %v37
    %v45 = vadd.f32 %v44, 1e-06
    %v46 = vrsqrt.pop %v45
    %v47 = vmul.f32 %v39, %v46
    %v49 = vlaneseq
    %v50 = vshrl.u32 %v49, 7
    %v51 = vsub.s32 0, %v50
    %v52 = vrot.slane %v28, %v51
    %v54 = vmul.f32 %v47, %v52
    %v56 = vlaneseq
    %v57 = vshrl.u32 %v56, 7
    %v58 = vsub.s32 0, %v57
    %v59 = vrot.slane %v29, %v58
    %v61 = vadd.f32 %v54, %v59
    %v62 = vpack.c.bf16 %v61, %v61
    %v63 = vld [vmem:[%s1] sm:$0xf]
    %v64 = vld [vmem:[%s1 + $0x4] sm:$0xf]
    %v65 = vld [vmem:[%s1 + $0x8] sm:$0xf]
    %v66 = vld [vmem:[%s1 + $0xc] sm:$0xf]
    %v68 = vlaneseq
    %v69 = vshrl.u32 %v68, 7
    %v70 = vsub.s32 0, %v69
    %v71 = vrot.slane %v30, %v70
    %v77 = vunpack.c.l.b16 %v63
    %v78 = vunpack.c.l.b16 %v64
    %v79 = vunpack.c.l.b16 %v65
    %v80 = vunpack.c.l.b16 %v66
    %v81 = vpack.c.b16 %v78, %v77
    %v82 = vpack.c.b16 %v80, %v79
    %v86 = vsel %vm33, %v62, 0
    %88 = vmatprep.subr.bf16.mxu0 0
    %89 = vmatpush1.bf16.msra.mxu0 %v81
    %90 = vmatprep.subr.bf16.mxu0 0
    %91 = vmatpush1.bf16.msra.mxu0 %v82
    %92 = vmatprep.subr.bf16.mxu0 0
    %93 = vmatpush1.bf16.msra.mxu0 0
    %94 = vmatprep.subr.bf16.mxu0 0
    %95 = vmatpush1.bf16.msra.mxu0 0
    %96 = vmatprep.subr.bf16.mxu0 0
    %97 = vmatpush1.bf16.msra.mxu0 0
    %98 = vmatprep.subr.bf16.mxu0 0
    %99 = vmatpush1.bf16.msra.mxu0 0
    %100 = vmatprep.subr.bf16.mxu0 0
    %101 = vmatpush1.bf16.msra.mxu0 0
    %102 = vmatprep.subr.bf16.mxu0 0
    %103 = vmatpush1.bf16.msra.mxu0 0
    %104 = vmatprep.subr.bf16.mxu0 0
    %105 = vmatpush1.bf16.msra.mxu0 0
    %106 = vmatprep.subr.bf16.mxu0 0
    %107 = vmatpush1.bf16.msra.mxu0 0
    %108 = vmatprep.subr.bf16.mxu0 0
    %109 = vmatpush1.bf16.msra.mxu0 0
    %110 = vmatprep.subr.bf16.mxu0 0
    %111 = vmatpush1.bf16.msra.mxu0 0
    %112 = vmatprep.subr.bf16.mxu0 0
    %113 = vmatpush1.bf16.msra.mxu0 0
    %114 = vmatprep.subr.bf16.mxu0 0
    %115 = vmatpush1.bf16.msra.mxu0 0
    %116 = vmatprep.subr.bf16.mxu0 0
    %117 = vmatpush1.bf16.msra.mxu0 0
    %118 = vmatprep.subr.bf16.mxu0 0
    %119 = vmatpush1.bf16.msra.mxu0 0
    %120 = vmatprep.mubr.bf16.mxu0 0
    %121 = vmatmul.mubr.bf16.gmra.mrb[0].mxu0 %v86
    %v122 = vpop.f32.mrb[0].mxu0
    %v123 = vadd.f32 %v71, %v122
    %v124 = vpop.f32.mrb[0].mxu0
    %v125 = vpop.f32.mrb[0].mxu0
    %v126 = vpop.f32.mrb[0].mxu0
    %127 = vdwg.mxu0
    %v128 = vmax.f32 %v123, 0.0
    %v129 = vpack.c.bf16 %v128, %v128
    %v130 = vld [vmem:[%s3] sm:$0xf]
    %v131 = vld [vmem:[%s3 + $0x4] sm:$0xf]
    %v132 = vld [vmem:[%s3 + $0x8] sm:$0xf]
    %v133 = vld [vmem:[%s3 + $0xc] sm:$0xf]
    %v134 = vld [vmem:[%s3 + $0x10] sm:$0xf]
    %v135 = vld [vmem:[%s3 + $0x14] sm:$0xf]
    %v136 = vld [vmem:[%s3 + $0x18] sm:$0xf]
    %v137 = vld [vmem:[%s3 + $0x1c] sm:$0xf]
    %v139 = vlaneseq
    %v140 = vshrl.u32 %v139, 7
    %v141 = vsub.s32 0, %v140
    %v142 = vrot.slane %v31, %v141
    %v152 = vunpack.c.l.b16 %v130
    %v153 = vunpack.c.l.b16 %v131
    %v154 = vunpack.c.l.b16 %v132
    %v155 = vunpack.c.l.b16 %v133
    %v156 = vunpack.c.l.b16 %v134
    %v157 = vunpack.c.l.b16 %v135
    %v158 = vunpack.c.l.b16 %v136
    %v159 = vunpack.c.l.b16 %v137
    %v160 = vpack.c.b16 %v153, %v152
    %v161 = vpack.c.b16 %v155, %v154
    %v162 = vpack.c.b16 %v157, %v156
    %v163 = vpack.c.b16 %v159, %v158
    %vm168 = vcmask 523264
    %v170 = vsel %vm168, %v129, 0
    %172 = vmatprep.subr.bf16.mxu0 0
    %173 = vmatpush1.bf16.msra.mxu0 %v160
    %174 = vmatprep.subr.bf16.mxu0 0
    %175 = vmatpush1.bf16.msra.mxu0 %v161
    %176 = vmatprep.subr.bf16.mxu0 0
    %177 = vmatpush1.bf16.msra.mxu0 %v162
    %178 = vmatprep.subr.bf16.mxu0 0
    %179 = vmatpush1.bf16.msra.mxu0 %v163
    %180 = vmatprep.subr.bf16.mxu0 0
    %181 = vmatpush1.bf16.msra.mxu0 0
    %182 = vmatprep.subr.bf16.mxu0 0
    %183 = vmatpush1.bf16.msra.mxu0 0
    %184 = vmatprep.subr.bf16.mxu0 0
    %185 = vmatpush1.bf16.msra.mxu0 0
    %186 = vmatprep.subr.bf16.mxu0 0
    %187 = vmatpush1.bf16.msra.mxu0 0
    %188 = vmatprep.subr.bf16.mxu0 0
    %189 = vmatpush1.bf16.msra.mxu0 0
    %190 = vmatprep.subr.bf16.mxu0 0
    %191 = vmatpush1.bf16.msra.mxu0 0
    %192 = vmatprep.subr.bf16.mxu0 0
    %193 = vmatpush1.bf16.msra.mxu0 0
    %194 = vmatprep.subr.bf16.mxu0 0
    %195 = vmatpush1.bf16.msra.mxu0 0
    %196 = vmatprep.subr.bf16.mxu0 0
    %197 = vmatpush1.bf16.msra.mxu0 0
    %198 = vmatprep.subr.bf16.mxu0 0
    %199 = vmatpush1.bf16.msra.mxu0 0
    %200 = vmatprep.subr.bf16.mxu0 0
    %201 = vmatpush1.bf16.msra.mxu0 0
    %202 = vmatprep.subr.bf16.mxu0 0
    %203 = vmatpush1.bf16.msra.mxu0 0
    %204 = vmatprep.mubr.bf16.mxu0 0
    %205 = vmatmul.mubr.bf16.gmra.mrb[0].mxu0 %v170
    %v206 = vpop.f32.mrb[0].mxu0
    %v207 = vadd.f32 %v142, %v206
    %v208 = vpop.f32.mrb[0].mxu0
    %v209 = vpop.f32.mrb[0].mxu0
    %v210 = vpop.f32.mrb[0].mxu0
    %211 = vdwg.mxu0
    %v212 = vadd.f32 %v207, %v32
    %213 = vst.msk [vmem:[#allocation2] sm:$0xff] %vm33, %v212
    %v214 = vld [vmem:[%s0 + $0x8] sm:$0xff]
    %v215 = vsel %vm33, %v214, 0.0
    %216 = vadd.xlane.f32.xlu0 %v215
    %v217 = vpop.xlane.xlu0 %216
    %v218 = vmul.f32 %v217, %v37
    %v219 = vsub.f32 %v214, %v218
    %v220 = vmul.f32 %v219, %v219
    %v221 = vsel %vm33, %v220, 0.0
    %222 = vadd.xlane.f32.xlu0 %v221
    %v223 = vpop.xlane.xlu0 %222
    %v224 = vmul.f32 %v223, %v37
    %v225 = vadd.f32 %v224, 1e-06
    %v226 = vrsqrt.pop %v225
    %v227 = vmul.f32 %v219, %v226
    %v228 = vmul.f32 %v227, %v52
    %v229 = vadd.f32 %v228, %v59
    %v230 = vpack.c.bf16 %v229, %v229
    %v231 = vld [vmem:[%s1] sm:$0xf]
    %v232 = vld [vmem:[%s1 + $0x4] sm:$0xf]
    %v233 = vld [vmem:[%s1 + $0x8] sm:$0xf]
    %v234 = vld [vmem:[%s1 + $0xc] sm:$0xf]
    %v239 = vunpack.c.l.b16 %v231
    %v240 = vunpack.c.l.b16 %v232
    %v241 = vunpack.c.l.b16 %v233
    %v242 = vunpack.c.l.b16 %v234
    %v243 = vpack.c.b16 %v240, %v239
    %v244 = vpack.c.b16 %v242, %v241
    %v248 = vsel %vm33, %v230, 0
    %250 = vmatprep.subr.bf16.mxu0 0
    %251 = vmatpush1.bf16.msra.mxu0 %v243
    %252 = vmatprep.subr.bf16.mxu0 0
    %253 = vmatpush1.bf16.msra.mxu0 %v244
    %254 = vmatprep.subr.bf16.mxu0 0
    %255 = vmatpush1.bf16.msra.mxu0 0
    %256 = vmatprep.subr.bf16.mxu0 0
    %257 = vmatpush1.bf16.msra.mxu0 0
    %258 = vmatprep.subr.bf16.mxu0 0
    %259 = vmatpush1.bf16.msra.mxu0 0
    %260 = vmatprep.subr.bf16.mxu0 0
    %261 = vmatpush1.bf16.msra.mxu0 0
    %262 = vmatprep.subr.bf16.mxu0 0
    %263 = vmatpush1.bf16.msra.mxu0 0
    %264 = vmatprep.subr.bf16.mxu0 0
    %265 = vmatpush1.bf16.msra.mxu0 0
    %266 = vmatprep.subr.bf16.mxu0 0
    %267 = vmatpush1.bf16.msra.mxu0 0
    %268 = vmatprep.subr.bf16.mxu0 0
    %269 = vmatpush1.bf16.msra.mxu0 0
    %270 = vmatprep.subr.bf16.mxu0 0
    %271 = vmatpush1.bf16.msra.mxu0 0
    %272 = vmatprep.subr.bf16.mxu0 0
    %273 = vmatpush1.bf16.msra.mxu0 0
    %274 = vmatprep.subr.bf16.mxu0 0
    %275 = vmatpush1.bf16.msra.mxu0 0
    %276 = vmatprep.subr.bf16.mxu0 0
    %277 = vmatpush1.bf16.msra.mxu0 0
    %278 = vmatprep.subr.bf16.mxu0 0
    %279 = vmatpush1.bf16.msra.mxu0 0
    %280 = vmatprep.subr.bf16.mxu0 0
    %281 = vmatpush1.bf16.msra.mxu0 0
    %282 = vmatprep.mubr.bf16.mxu0 0
    %283 = vmatmul.mubr.bf16.gmra.mrb[0].mxu0 %v248
    %v284 = vpop.f32.mrb[0].mxu0
    %v285 = vadd.f32 %v71, %v284
    %v286 = vpop.f32.mrb[0].mxu0
    %v287 = vpop.f32.mrb[0].mxu0
    %v288 = vpop.f32.mrb[0].mxu0
    %289 = vdwg.mxu0
    %v290 = vmax.f32 %v285, 0.0
    %v291 = vpack.c.bf16 %v290, %v290
    %v292 = vld [vmem:[%s3] sm:$0xf]
    %v293 = vld [vmem:[%s3 + $0x4] sm:$0xf]
    %v294 = vld [vmem:[%s3 + $0x8] sm:$0xf]
    %v295 = vld [vmem:[%s3 + $0xc] sm:$0xf]
    %v296 = vld [vmem:[%s3 + $0x10] sm:$0xf]
    %v297 = vld [vmem:[%s3 + $0x14] sm:$0xf]
    %v298 = vld [vmem:[%s3 + $0x18] sm:$0xf]
    %v299 = vld [vmem:[%s3 + $0x1c] sm:$0xf]
    %v308 = vunpack.c.l.b16 %v292
    %v309 = vunpack.c.l.b16 %v293
    %v310 = vunpack.c.l.b16 %v294
    %v311 = vunpack.c.l.b16 %v295
    %v312 = vunpack.c.l.b16 %v296
    %v313 = vunpack.c.l.b16 %v297
    %v314 = vunpack.c.l.b16 %v298
    %v315 = vunpack.c.l.b16 %v299
    %v316 = vpack.c.b16 %v309, %v308
    %v317 = vpack.c.b16 %v311, %v310
    %v318 = vpack.c.b16 %v313, %v312
    %v319 = vpack.c.b16 %v315, %v314
    %v325 = vsel %vm168, %v291, 0
    %327 = vmatprep.subr.bf16.mxu0 0
    %328 = vmatpush1.bf16.msra.mxu0 %v316
    %329 = vmatprep.subr.bf16.mxu0 0
    %330 = vmatpush1.bf16.msra.mxu0 %v317
    %331 = vmatprep.subr.bf16.mxu0 0
    %332 = vmatpush1.bf16.msra.mxu0 %v318
    %333 = vmatprep.subr.bf16.mxu0 0
    %334 = vmatpush1.bf16.msra.mxu0 %v319
    %335 = vmatprep.subr.bf16.mxu0 0
    %336 = vmatpush1.bf16.msra.mxu0 0
    %337 = vmatprep.subr.bf16.mxu0 0
    %338 = vmatpush1.bf16.msra.mxu0 0
    %339 = vmatprep.subr.bf16.mxu0 0
    %340 = vmatpush1.bf16.msra.mxu0 0
    %341 = vmatprep.subr.bf16.mxu0 0
    %342 = vmatpush1.bf16.msra.mxu0 0
    %343 = vmatprep.subr.bf16.mxu0 0
    %344 = vmatpush1.bf16.msra.mxu0 0
    %345 = vmatprep.subr.bf16.mxu0 0
    %346 = vmatpush1.bf16.msra.mxu0 0
    %347 = vmatprep.subr.bf16.mxu0 0
    %348 = vmatpush1.bf16.msra.mxu0 0
    %349 = vmatprep.subr.bf16.mxu0 0
    %350 = vmatpush1.bf16.msra.mxu0 0
    %351 = vmatprep.subr.bf16.mxu0 0
    %352 = vmatpush1.bf16.msra.mxu0 0
    %353 = vmatprep.subr.bf16.mxu0 0
    %354 = vmatpush1.bf16.msra.mxu0 0
    %355 = vmatprep.subr.bf16.mxu0 0
    %356 = vmatpush1.bf16.msra.mxu0 0
    %357 = vmatprep.subr.bf16.mxu0 0
    %358 = vmatpush1.bf16.msra.mxu0 0
    %359 = vmatprep.mubr.bf16.mxu0 0
    %360 = vmatmul.mubr.bf16.gmra.mrb[0].mxu0 %v325
    %v361 = vpop.f32.mrb[0].mxu0
    %v362 = vadd.f32 %v142, %v361
    %v363 = vpop.f32.mrb[0].mxu0
    %v364 = vpop.f32.mrb[0].mxu0
    %v365 = vpop.f32.mrb[0].mxu0
    %366 = vdwg.mxu0
    %v367 = vadd.f32 %v362, %v214
    %368 = vst.msk [vmem:[#allocation2 + $0x8] sm:$0xff] %vm33, %v367
    // Predicated region
    $region30: #{tpu_custom_call.1} parent=1 // pred_check
      _
    $region31: #{tpu_custom_call.1} parent=1 // pred_check_branch
      %370 = sbr.rel (0) target = $region33
    $region32: #{tpu_custom_call.1} parent=1 // pred_region
      %s372 = ssub.s32 256, 256
      %373 = vsyncadd [#allocation3], %s372
      %s374 = sshll.u32 [#allocation2], 4
      %s375 = int_to_ptr.vmem [resolvable:$true] %s374
      %380 = dma.vmem_to_hbm [thread:$0]  %s375, 256, %s7, [#allocation3], 128, 128, 8
    $region33: #{tpu_custom_call.1} parent=1 // pred_fallthru
      _
    // Predicated region
    $region34: #{tpu_custom_call.1} parent=1 // pred_check
      _
    $region35: #{tpu_custom_call.1} parent=1 // pred_check_branch
      %382 = sbr.rel (0) target = $region37
    $region36: #{tpu_custom_call.1} parent=1 // pred_region
      %383 = dma.done [#allocation3], 256
    $region37: #{tpu_custom_call.1} parent=1 // pred_fallthru
      _
    %384 = vsyncpa [#allocation3], 1

</llo_original>
